<compile_context>
chip_gen: v5e
topology: v5e:2x2
jax: 0.10.0
libtpu: 0.0.40
codegen_flags: <defaults>
</compile_context>

<pallas_src>
import functools

import jax
import jax.numpy as jnp
from jax.experimental import pallas as pl
from jax.experimental.pallas import tpu as pltpu

NEG_SLOPE = 0.01                  # PyTorch LeakyReLU default
CONV_K, CONV_STRIDE, CONV_PAD = 3, 2, 1
N_GLU = 4                         # conv channels after GLU (8 -> 4)
F_DIM = 60                        # flattened feature dim hard-coded by the module
F_PAD = 64                        # features padded to a lane/sublane friendly width
SLAB = 128                        # fused lane-dense output width
PRED_COL = 63                     # where the regressor scalar lands inside the slab


def _leaky(x):
    return jnp.where(x > 0, x, NEG_SLOPE * x)


def _round_up(n, m):
    return ((n + m - 1) // m) * m


# ---------------------------------------------------------------------------
# Fused kernel: conv(as matmul) + LeakyReLU + GLU + adapter + regressor
# ---------------------------------------------------------------------------
def _fused_kernel(x_ref, wa_ref, ba_ref, wg_ref, bg_ref,
                  aw_ref, w1_ref, b1_ref, w2_ref, bout_ref, out_ref):
    """Per batch tile.

    x_ref   : (TB, C*L)   flattened NCL sample rows
    wa_ref  : (C*L, 64)   conv weights, GLU 'value' half (channel-major cols)
    wg_ref  : (C*L, 64)   conv weights, GLU gate half
    ba/bg   : (1, 64)     conv biases broadcast over the 15 output positions
    aw_ref  : (64, 64)    adapter weight (rows 60..63 zero)
    w1_ref  : (64, H)     regressor layer-1 weight
    b1_ref  : (1, H)
    w2_ref  : (H, 64)     regressor layer-2 weight placed in column 63
    bout_ref: (1, 128)    fused slab bias (reg bias @63, adapter bias @64..127)
    out_ref : (TB, 128)   [features(60) | 0 | pred | hint(64)]
    """
    x = x_ref[...]
    dot = functools.partial(jnp.dot, preferred_element_type=jnp.float32)

    # Conv1d + LeakyReLU, one dot per GLU half; output columns are already in
    # PyTorch-Flatten (channel-major) order -> no in-kernel transpose.
    ya = _leaky(dot(x, wa_ref[...]) + ba_ref[...])            # (TB, 64) f32
    yg = _leaky(dot(x, wg_ref[...]) + bg_ref[...])            # (TB, 64) f32
    feat = ya * jax.nn.sigmoid(yg)                            # GLU; cols 60..63 == 0

    feat_op = feat.astype(x.dtype)                            # MXU operand dtype
    hint = dot(feat_op, aw_ref[...])                          # (TB, 64)
    h = _leaky(dot(feat_op, w1_ref[...]) + b1_ref[...])       # (TB, H); Dropout = id (eval)
    pred_placed = dot(h.astype(x.dtype), w2_ref[...])         # (TB, 64); value at col 63 only

    bout = bout_ref[...]                                      # (1, 128)
    out_ref[:, :F_PAD] = feat + pred_placed + bout[:, :F_PAD]
    out_ref[:, F_PAD:] = hint + bout[:, F_PAD:]


# ---------------------------------------------------------------------------
# Trace-time operand preparation (conv -> dense matmul, flatten -> weight layout)
# ---------------------------------------------------------------------------
def _prepare_operands(params, input_dim, seq_len, compute_dtype):
    L = seq_len
    L_out = (L + 2 * CONV_PAD - CONV_K) // CONV_STRIDE + 1
    if N_GLU * L_out != F_DIM:
        raise ValueError("module hard-codes a flattened feature dim of 60")
    k_in = input_dim * L
    hidden = params["reg_w1"].shape[0]

    conv_w = params["conv_w"].astype(jnp.float32)             # (8, C, 3)
    conv_b = params["conv_b"].astype(jnp.float32)             # (8,)

    # Scatter the conv taps into dense (C*L, 64) matrices so the whole conv is
    # a single MXU matmul on the raw flattened rows; columns are channel-major.
    oc, ic, kk, op = jnp.meshgrid(jnp.arange(N_GLU), jnp.arange(input_dim),
                                  jnp.arange(CONV_K), jnp.arange(L_out),
                                  indexing="ij")
    p_in = op * CONV_STRIDE + kk - CONV_PAD                   # input position (OOB => zero pad)
    valid = (p_in >= 0) & (p_in < L)
    rows = (ic * L + jnp.clip(p_in, 0, L - 1)).ravel()
    cols = (oc * L_out + op).ravel()

    def conv_as_matmul(w_half):                               # (4, C, 3) -> (C*L, 64)
        vals = jnp.where(valid, w_half[oc, ic, kk], 0.0).ravel()
        return jnp.zeros((k_in, F_PAD), jnp.float32).at[rows, cols].add(vals)

    w_a = conv_as_matmul(conv_w[:N_GLU])
    w_g = conv_as_matmul(conv_w[N_GLU:])
    b_a = jnp.zeros((1, F_PAD), jnp.float32).at[0, :F_DIM].set(
        jnp.repeat(conv_b[:N_GLU], L_out))
    b_g = jnp.zeros((1, F_PAD), jnp.float32).at[0, :F_DIM].set(
        jnp.repeat(conv_b[N_GLU:], L_out))

    # Heads: pad the 60-wide feature axis to 64 (the padded feature cols are 0).
    aw = jnp.zeros((F_PAD, 64), jnp.float32).at[:F_DIM, :].set(params["adapter_w"].T)
    w1 = jnp.zeros((F_PAD, hidden), jnp.float32).at[:F_DIM, :].set(params["reg_w1"].T)
    b1 = params["reg_b1"].reshape(1, hidden).astype(jnp.float32)
    w2 = jnp.zeros((hidden, F_PAD), jnp.float32).at[:, PRED_COL].set(params["reg_w2"][0])

    # Fused slab bias: regressor output bias at col 63, adapter bias at 64..127.
    b_out = jnp.zeros((1, SLAB), jnp.float32)
    b_out = b_out.at[0, PRED_COL].set(params["reg_b2"][0])
    b_out = b_out.at[0, F_PAD:].set(params["adapter_b"])

    cd = compute_dtype
    ops = (w_a.astype(cd), b_a, w_g.astype(cd), b_g,
           aw.astype(cd), w1.astype(cd), b1, w2.astype(cd), b_out)
    return ops, hidden


# ---------------------------------------------------------------------------
# Forward wrapper
# ---------------------------------------------------------------------------
def cnn_rul_student_glu_forward(x, params, *, compute_dtype=jnp.float32, tile_b=512):
    """x: (B, input_dim, L) float32 -> (predictions (B,), features (B,60), hint (B,64))."""
    B, C, L = x.shape
    (w_a, b_a, w_g, b_g, aw, w1, b1, w2, b_out), hidden = _prepare_operands(
        params, C, L, compute_dtype)
    k_in = C * L

    # Batch tiling: (8,128)-friendly row tiles, double-buffered by the Pallas
    # pipeline.  Weights use a constant index_map so they stay resident in VMEM
    # across grid steps.  Per-step VMEM ~1 MiB -> safe on v5e/v6e/v7x defaults.
    tb = min(tile_b, _round_up(B, 8))
    b_pad = _round_up(B, tb)
    x_flat = x.reshape(B, k_in).astype(compute_dtype)
    if b_pad != B:
        x_flat = jnp.pad(x_flat, ((0, b_pad - B), (0, 0)))

    row = lambda i: (i, 0)
    rep = lambda i: (0, 0)

    slab = pl.pallas_call(
        _fused_kernel,
        out_shape=jax.ShapeDtypeStruct((b_pad, SLAB), jnp.float32),
        grid=(b_pad // tb,),
        in_specs=[
            pl.BlockSpec((tb, k_in), row),          # x rows
            pl.BlockSpec((k_in, F_PAD), rep),       # w_a
            pl.BlockSpec((1, F_PAD), rep),          # b_a
            pl.BlockSpec((k_in, F_PAD), rep),       # w_g
            pl.BlockSpec((1, F_PAD), rep),          # b_g
            pl.BlockSpec((F_PAD, 64), rep),         # adapter weight
            pl.BlockSpec((F_PAD, hidden), rep),     # regressor layer-1 weight
            pl.BlockSpec((1, hidden), rep),         # regressor layer-1 bias
            pl.BlockSpec((hidden, F_PAD), rep),     # regressor layer-2 weight (placed)
            pl.BlockSpec((1, SLAB), rep),           # fused slab bias
        ],
        out_specs=pl.BlockSpec((tb, SLAB), row),
        compiler_params=pltpu.CompilerParams(
            dimension_semantics=("parallel",)),     # shards batch tiles across v7x's 2 TCs
    )(x_flat, w_a, b_a, w_g, b_g, aw, w1, b1, w2, b_out)

    slab = slab[:B]
    features = slab[:, :F_DIM]                      # (B, 60), PyTorch Flatten order
    predictions = slab[:, PRED_COL]                 # (B,)
    hint = slab[:, F_PAD:]                          # (B, 64)
    return predictions, features, hint


# ---------------------------------------------------------------------------
# Test scaffolding
# ---------------------------------------------------------------------------
def make_params(key, input_dim, hidden_dim):
    ks = jax.random.split(key, 8)
    scale = 0.1
    return {
        "conv_w": scale * jax.random.normal(ks[0], (8, input_dim, 3), jnp.float32),
        "conv_b": scale * jax.random.normal(ks[1], (8,), jnp.float32),
        "adapter_w": scale * jax.random.normal(ks[2], (64, 60), jnp.float32),
        "adapter_b": scale * jax.random.normal(ks[3], (64,), jnp.float32),
        "reg_w1": scale * jax.random.normal(ks[4], (hidden_dim, 60), jnp.float32),
        "reg_b1": scale * jax.random.normal(ks[5], (hidden_dim,), jnp.float32),
        "reg_w2": scale * jax.random.normal(ks[6], (1, hidden_dim), jnp.float32),
        "reg_b2": scale * jax.random.normal(ks[7], (1,), jnp.float32),
    }


def _reference_forward(x, params):
    """Pure-JAX reference of the PyTorch forward (eval mode)."""
    B, C, L = x.shape
    L_out = 15
    xp = jnp.pad(x, ((0, 0), (0, 0), (1, 1)))
    idx = 2 * jnp.arange(L_out)[:, None] + jnp.arange(3)[None, :]
    patches = xp[:, :, idx].transpose(0, 2, 1, 3).reshape(B * L_out, C * 3)
    y = patches @ params["conv_w"].reshape(8, C * 3).T + params["conv_b"]
    y = jnp.where(y > 0, y, NEG_SLOPE * y)
    g = y[:, :4] * jax.nn.sigmoid(y[:, 4:8])
    feat = g.reshape(B, L_out, 4).transpose(0, 2, 1).reshape(B, 4 * L_out)
    hint = feat @ params["adapter_w"].T + params["adapter_b"]
    h = feat @ params["reg_w1"].T + params["reg_b1"]
    h = jnp.where(h > 0, h, NEG_SLOPE * h)
    pred = h @ params["reg_w2"].T + params["reg_b2"]
    return pred[:, 0], feat, hint


if __name__ == "__main__":
    key = jax.random.PRNGKey(0)
    k_x, k_p, k_x2 = jax.random.split(key, 3)

    B, input_dim, L, hidden_dim = 2, 4, 30, 32      # L=30 -> conv out 15 -> flat 60
    x = jax.random.normal(k_x, (B, input_dim, L), jnp.float32)
    params = make_params(k_p, input_dim, hidden_dim)

    # Tolerances account for MXU default-precision (bf16-pass) differences
    # between the Pallas kernel and the XLA reference; structural errors would
    # be O(0.05) or larger.
    tol = dict(atol=5e-3, rtol=1e-2)

    # --- f32 path, small batch (single grid step) --------------------------
    preds, feats, hint = jax.block_until_ready(cnn_rul_student_glu_forward(x, params))
    r_preds, r_feats, r_hint = _reference_forward(x, params)
    assert preds.shape == (B,) and feats.shape == (B, 60) and hint.shape == (B, 64)
    assert jnp.allclose(preds, r_preds, **tol)
    assert jnp.allclose(feats, r_feats, **tol)
    assert jnp.allclose(hint, r_hint, **tol)

    # --- f32 path, multi-tile grid (batch padded to a multiple of 512) -----
    B2 = 1100
    x2 = jax.random.normal(k_x2, (B2, input_dim, L), jnp.float32)
    p2, f2, h2 = jax.block_until_ready(cnn_rul_student_glu_forward(x2, params))
    rp2, rf2, rh2 = _reference_forward(x2, params)
    assert p2.shape == (B2,) and f2.shape == (B2, 60) and h2.shape == (B2, 64)
    assert jnp.allclose(p2, rp2, **tol)
    assert jnp.allclose(f2, rf2, **tol)
    assert jnp.allclose(h2, rh2, **tol)

    # --- bf16-operand path (v5e/v6e recommendation; elementwise stays f32) --
    pb, fb, hb = jax.block_until_ready(
        cnn_rul_student_glu_forward(x, params, compute_dtype=jnp.bfloat16))
    lt = dict(atol=3e-2, rtol=3e-2)
    assert jnp.allclose(pb, r_preds, **lt)
    assert jnp.allclose(fb, r_feats, **lt)
    assert jnp.allclose(hb, r_hint, **lt)

    print("KERNEL_OK")
</pallas_src>

<mosaic_0001>
module attributes {stable_mosaic.version = 11 : i64} {
  func.func @_fused_kernel(%arg0: i32, %arg1: memref<8x120xf32, #tpu.memory_space<vmem>>, %arg2: memref<120x64xf32, #tpu.memory_space<vmem>>, %arg3: memref<1x64xf32, #tpu.memory_space<vmem>>, %arg4: memref<120x64xf32, #tpu.memory_space<vmem>>, %arg5: memref<1x64xf32, #tpu.memory_space<vmem>>, %arg6: memref<64x64xf32, #tpu.memory_space<vmem>>, %arg7: memref<64x32xf32, #tpu.memory_space<vmem>>, %arg8: memref<1x32xf32, #tpu.memory_space<vmem>>, %arg9: memref<32x64xf32, #tpu.memory_space<vmem>>, %arg10: memref<1x128xf32, #tpu.memory_space<vmem>>, %arg11: memref<8x128xf32, #tpu.memory_space<vmem>>) attributes {dimension_semantics = [#tpu.dimension_semantics<parallel>], iteration_bounds = array<i64: 1>, scalar_prefetch = 0 : i64, scratch_operands = 0 : i64, tpu.core_type = #tpu.core_type<tc>, window_params = [{transform_indices = @transform_0, window_bounds = array<i64: 8, 120>}, {pipeline_mode = #tpu.pipeline_mode<synchronous>, transform_indices = @transform_1, window_bounds = array<i64: 120, 64>}, {pipeline_mode = #tpu.pipeline_mode<synchronous>, transform_indices = @transform_2, window_bounds = array<i64: 1, 64>}, {pipeline_mode = #tpu.pipeline_mode<synchronous>, transform_indices = @transform_3, window_bounds = array<i64: 120, 64>}, {pipeline_mode = #tpu.pipeline_mode<synchronous>, transform_indices = @transform_4, window_bounds = array<i64: 1, 64>}, {pipeline_mode = #tpu.pipeline_mode<synchronous>, transform_indices = @transform_5, window_bounds = array<i64: 64, 64>}, {pipeline_mode = #tpu.pipeline_mode<synchronous>, transform_indices = @transform_6, window_bounds = array<i64: 64, 32>}, {pipeline_mode = #tpu.pipeline_mode<synchronous>, transform_indices = @transform_7, window_bounds = array<i64: 1, 32>}, {pipeline_mode = #tpu.pipeline_mode<synchronous>, transform_indices = @transform_8, window_bounds = array<i64: 32, 64>}, {pipeline_mode = #tpu.pipeline_mode<synchronous>, transform_indices = @transform_9, window_bounds = array<i64: 1, 128>}, {transform_indices = @transform_10, window_bounds = array<i64: 8, 128>}]} {
    %c0 = arith.constant 0 : index
    %c0_0 = arith.constant 0 : index
    %0 = vector.load %arg1[%c0, %c0_0] : memref<8x120xf32, #tpu.memory_space<vmem>>, vector<8x120xf32>
    %c0_1 = arith.constant 0 : index
    %c0_2 = arith.constant 0 : index
    %1 = vector.load %arg2[%c0_1, %c0_2] : memref<120x64xf32, #tpu.memory_space<vmem>>, vector<120x64xf32>
    %cst = arith.constant dense<0.000000e+00> : vector<8x64xf32>
    %2 = tpu.matmul %0, %1, %cst {dimension_numbers = #tpu.dot_dimension_numbers<[1], [0], [0], [1], [0, 0, 1, 1], [], []>} : vector<8x120xf32>, vector<120x64xf32>, vector<8x64xf32> -> vector<8x64xf32>
    %c0_3 = arith.constant 0 : index
    %c0_4 = arith.constant 0 : index
    %3 = vector.load %arg3[%c0_3, %c0_4] : memref<1x64xf32, #tpu.memory_space<vmem>>, vector<1x64xf32>
    %4 = vector.broadcast %3 : vector<1x64xf32> to vector<8x64xf32>
    %5 = arith.addf %2, %4 : vector<8x64xf32>
    %cst_5 = arith.constant 0.000000e+00 : f32
    %6 = vector.broadcast %cst_5 : f32 to vector<8x64xf32>
    %7 = arith.cmpf ogt, %5, %6 : vector<8x64xf32>
    %cst_6 = arith.constant 0.00999999977 : f32
    %8 = vector.broadcast %cst_6 : f32 to vector<8x64xf32>
    %9 = arith.mulf %8, %5 : vector<8x64xf32>
    %10 = arith.select %7, %5, %9 : vector<8x64xi1>, vector<8x64xf32>
    %c0_7 = arith.constant 0 : index
    %c0_8 = arith.constant 0 : index
    %11 = vector.load %arg4[%c0_7, %c0_8] : memref<120x64xf32, #tpu.memory_space<vmem>>, vector<120x64xf32>
    %cst_9 = arith.constant dense<0.000000e+00> : vector<8x64xf32>
    %12 = tpu.matmul %0, %11, %cst_9 {dimension_numbers = #tpu.dot_dimension_numbers<[1], [0], [0], [1], [0, 0, 1, 1], [], []>} : vector<8x120xf32>, vector<120x64xf32>, vector<8x64xf32> -> vector<8x64xf32>
    %c0_10 = arith.constant 0 : index
    %c0_11 = arith.constant 0 : index
    %13 = vector.load %arg5[%c0_10, %c0_11] : memref<1x64xf32, #tpu.memory_space<vmem>>, vector<1x64xf32>
    %14 = vector.broadcast %13 : vector<1x64xf32> to vector<8x64xf32>
    %15 = arith.addf %12, %14 : vector<8x64xf32>
    %cst_12 = arith.constant 0.000000e+00 : f32
    %16 = vector.broadcast %cst_12 : f32 to vector<8x64xf32>
    %17 = arith.cmpf ogt, %15, %16 : vector<8x64xf32>
    %cst_13 = arith.constant 0.00999999977 : f32
    %18 = vector.broadcast %cst_13 : f32 to vector<8x64xf32>
    %19 = arith.mulf %18, %15 : vector<8x64xf32>
    %20 = arith.select %17, %15, %19 : vector<8x64xi1>, vector<8x64xf32>
    %21 = arith.negf %20 : vector<8x64xf32>
    %22 = math.exp %21 : vector<8x64xf32>
    %cst_14 = arith.constant 1.000000e+00 : f32
    %23 = vector.broadcast %cst_14 : f32 to vector<8x64xf32>
    %24 = arith.addf %23, %22 : vector<8x64xf32>
    %25 = arith.divf %23, %24 : vector<8x64xf32>
    %26 = arith.mulf %10, %25 : vector<8x64xf32>
    %c0_15 = arith.constant 0 : index
    %c0_16 = arith.constant 0 : index
    %27 = vector.load %arg6[%c0_15, %c0_16] : memref<64x64xf32, #tpu.memory_space<vmem>>, vector<64x64xf32>
    %cst_17 = arith.constant dense<0.000000e+00> : vector<8x64xf32>
    %28 = tpu.matmul %26, %27, %cst_17 {dimension_numbers = #tpu.dot_dimension_numbers<[1], [0], [0], [1], [0, 0, 1, 1], [], []>} : vector<8x64xf32>, vector<64x64xf32>, vector<8x64xf32> -> vector<8x64xf32>
    %c0_18 = arith.constant 0 : index
    %c0_19 = arith.constant 0 : index
    %29 = vector.load %arg7[%c0_18, %c0_19] : memref<64x32xf32, #tpu.memory_space<vmem>>, vector<64x32xf32>
    %cst_20 = arith.constant dense<0.000000e+00> : vector<8x32xf32>
    %30 = tpu.matmul %26, %29, %cst_20 {dimension_numbers = #tpu.dot_dimension_numbers<[1], [0], [0], [1], [0, 0, 1, 1], [], []>} : vector<8x64xf32>, vector<64x32xf32>, vector<8x32xf32> -> vector<8x32xf32>
    %c0_21 = arith.constant 0 : index
    %c0_22 = arith.constant 0 : index
    %31 = vector.load %arg8[%c0_21, %c0_22] : memref<1x32xf32, #tpu.memory_space<vmem>>, vector<1x32xf32>
    %32 = vector.broadcast %31 : vector<1x32xf32> to vector<8x32xf32>
    %33 = arith.addf %30, %32 : vector<8x32xf32>
    %cst_23 = arith.constant 0.000000e+00 : f32
    %34 = vector.broadcast %cst_23 : f32 to vector<8x32xf32>
    %35 = arith.cmpf ogt, %33, %34 : vector<8x32xf32>
    %cst_24 = arith.constant 0.00999999977 : f32
    %36 = vector.broadcast %cst_24 : f32 to vector<8x32xf32>
    %37 = arith.mulf %36, %33 : vector<8x32xf32>
    %38 = arith.select %35, %33, %37 : vector<8x32xi1>, vector<8x32xf32>
    %c0_25 = arith.constant 0 : index
    %c0_26 = arith.constant 0 : index
    %39 = vector.load %arg9[%c0_25, %c0_26] : memref<32x64xf32, #tpu.memory_space<vmem>>, vector<32x64xf32>
    %cst_27 = arith.constant dense<0.000000e+00> : vector<8x64xf32>
    %40 = tpu.matmul %38, %39, %cst_27 {dimension_numbers = #tpu.dot_dimension_numbers<[1], [0], [0], [1], [0, 0, 1, 1], [], []>} : vector<8x32xf32>, vector<32x64xf32>, vector<8x64xf32> -> vector<8x64xf32>
    %c0_28 = arith.constant 0 : index
    %c0_29 = arith.constant 0 : index
    %41 = vector.load %arg10[%c0_28, %c0_29] : memref<1x128xf32, #tpu.memory_space<vmem>>, vector<1x128xf32>
    %42 = arith.addf %26, %40 : vector<8x64xf32>
    %43 = vector.extract_strided_slice %41 {offsets = [0, 0], sizes = [1, 64], strides = [1, 1]} : vector<1x128xf32> to vector<1x64xf32>
    %44 = vector.broadcast %43 : vector<1x64xf32> to vector<8x64xf32>
    %45 = arith.addf %42, %44 : vector<8x64xf32>
    %c0_30 = arith.constant 0 : index
    %c0_31 = arith.constant 0 : index
    %46 = vector.load %arg11[%c0_30, %c0_31] : memref<8x128xf32, #tpu.memory_space<vmem>>, vector<8x64xf32>
    tpu.vector_store %arg11[%c0_30, %c0_31], %45 {strides = array<i32>} : memref<8x128xf32, #tpu.memory_space<vmem>>, vector<8x64xf32>,
    %47 = vector.extract_strided_slice %41 {offsets = [0, 64], sizes = [1, 64], strides = [1, 1]} : vector<1x128xf32> to vector<1x64xf32>
    %48 = vector.broadcast %47 : vector<1x64xf32> to vector<8x64xf32>
    %49 = arith.addf %28, %48 : vector<8x64xf32>
    %c0_32 = arith.constant 0 : index
    %c64 = arith.constant 64 : index
    %50 = vector.load %arg11[%c0_32, %c64] : memref<8x128xf32, #tpu.memory_space<vmem>>, vector<8x64xf32>
    tpu.vector_store %arg11[%c0_32, %c64], %49 {strides = array<i32>} : memref<8x128xf32, #tpu.memory_space<vmem>>, vector<8x64xf32>,
    return
  }
  func.func @transform_0(%arg0: i32) -> (i32, i32) {
    %c0_i32 = arith.constant 0 : i32
    %c0_i32_0 = arith.constant 0 : i32
    return %arg0, %c0_i32 : i32, i32
  }
  func.func @transform_1(%arg0: i32) -> (i32, i32) {
    %c0_i32 = arith.constant 0 : i32
    %c0_i32_0 = arith.constant 0 : i32
    %c0_i32_1 = arith.constant 0 : i32
    return %c0_i32, %c0_i32_0 : i32, i32
  }
  func.func @transform_2(%arg0: i32) -> (i32, i32) {
    %c0_i32 = arith.constant 0 : i32
    %c0_i32_0 = arith.constant 0 : i32
    %c0_i32_1 = arith.constant 0 : i32
    return %c0_i32, %c0_i32_0 : i32, i32
  }
  func.func @transform_3(%arg0: i32) -> (i32, i32) {
    %c0_i32 = arith.constant 0 : i32
    %c0_i32_0 = arith.constant 0 : i32
    %c0_i32_1 = arith.constant 0 : i32
    return %c0_i32, %c0_i32_0 : i32, i32
  }
  func.func @transform_4(%arg0: i32) -> (i32, i32) {
    %c0_i32 = arith.constant 0 : i32
    %c0_i32_0 = arith.constant 0 : i32
    %c0_i32_1 = arith.constant 0 : i32
    return %c0_i32, %c0_i32_0 : i32, i32
  }
  func.func @transform_5(%arg0: i32) -> (i32, i32) {
    %c0_i32 = arith.constant 0 : i32
    %c0_i32_0 = arith.constant 0 : i32
    %c0_i32_1 = arith.constant 0 : i32
    return %c0_i32, %c0_i32_0 : i32, i32
  }
  func.func @transform_6(%arg0: i32) -> (i32, i32) {
    %c0_i32 = arith.constant 0 : i32
    %c0_i32_0 = arith.constant 0 : i32
    %c0_i32_1 = arith.constant 0 : i32
    return %c0_i32, %c0_i32_0 : i32, i32
  }
  func.func @transform_7(%arg0: i32) -> (i32, i32) {
    %c0_i32 = arith.constant 0 : i32
    %c0_i32_0 = arith.constant 0 : i32
    %c0_i32_1 = arith.constant 0 : i32
    return %c0_i32, %c0_i32_0 : i32, i32
  }
  func.func @transform_8(%arg0: i32) -> (i32, i32) {
    %c0_i32 = arith.constant 0 : i32
    %c0_i32_0 = arith.constant 0 : i32
    %c0_i32_1 = arith.constant 0 : i32
    return %c0_i32, %c0_i32_0 : i32, i32
  }
  func.func @transform_9(%arg0: i32) -> (i32, i32) {
    %c0_i32 = arith.constant 0 : i32
    %c0_i32_0 = arith.constant 0 : i32
    %c0_i32_1 = arith.constant 0 : i32
    return %c0_i32, %c0_i32_0 : i32, i32
  }
  func.func @transform_10(%arg0: i32) -> (i32, i32) {
    %c0_i32 = arith.constant 0 : i32
    %c0_i32_0 = arith.constant 0 : i32
    return %arg0, %c0_i32 : i32, i32
  }
}

</mosaic_0001>

<llo_original>
// kernel: tpu_custom_call.1
$region0: #{tpu_custom_call.1}
  #allocation0 [shape = 'u32[]', space=smem, size = 0x4, offset = 0x4, fixed_abs, tag = 'smem constant byte address 0x4 - core index']
  #allocation1 [shape = 'u32[72,128]{1,0:T(1,128)}', space=vmem, size = 0x9000, scoped, tag = 'internal scratch']
  %s0 = inlined_call_operand.vmem [shape: f32[8,120], index: 0, kind: input, shape index: {}]
  %s1 = inlined_call_operand.vmem [shape: f32[120,64], index: 1, kind: input, shape index: {}]
  %s2 = inlined_call_operand.vmem [shape: f32[1,64], index: 2, kind: input, shape index: {}]
  %s3 = inlined_call_operand.vmem [shape: f32[120,64], index: 3, kind: input, shape index: {}]
  %s4 = inlined_call_operand.vmem [shape: f32[1,64], index: 4, kind: input, shape index: {}]
  %s5 = inlined_call_operand.vmem [shape: f32[64,64], index: 5, kind: input, shape index: {}]
  %s6 = inlined_call_operand.vmem [shape: f32[64,32], index: 6, kind: input, shape index: {}]
  %s7 = inlined_call_operand.vmem [shape: f32[1,32], index: 7, kind: input, shape index: {}]
  %s8 = inlined_call_operand.vmem [shape: f32[32,64], index: 8, kind: input, shape index: {}]
  %s9 = inlined_call_operand.vmem [shape: f32[1,128], index: 9, kind: input, shape index: {}]
  %s10 = inlined_call_operand.hbm [shape: f32[8,128], index: 10, kind: output, shape index: {}]
  %s11 = sld [smem:[#allocation0]]
  $region50: #{tpu_custom_call.1} parent=0
    _
  %s13 = ssub.s32 1, %s11
  %s14 = scalar_select 0, %s13, %s11
  $region1: #{tpu_custom_call.1} parent=0
    #allocation2 [shape = 'u8[4096]{0}', space=vmem, size = 0x1000, scoped, tag = 'output window, operand 0, single buffered']
    #allocation3 [shape = 's32[1]{0}', space=sflag, size = 0x4, scoped, tag = 'scoped memory for tpu_custom_call.1']
    %15 = vsyncpa [#allocation3], 0
    // Predicated region
    $region2: #{tpu_custom_call.1} parent=1 // pred_check
      _
    $region3: #{tpu_custom_call.1} parent=1 // pred_check_branch
      %17 = sbr.rel (0) target = $region5
    $region4: #{tpu_custom_call.1} parent=1 // pred_region
      _
    $region5: #{tpu_custom_call.1} parent=1 // pred_fallthru
      _
    // Predicated region
    $region6: #{tpu_custom_call.1} parent=1 // pred_check
      _
    $region7: #{tpu_custom_call.1} parent=1 // pred_check_branch
      %19 = sbr.rel (0) target = $region9
    $region8: #{tpu_custom_call.1} parent=1 // pred_region
      _
    $region9: #{tpu_custom_call.1} parent=1 // pred_fallthru
      _
    // Predicated region
    $region10: #{tpu_custom_call.1} parent=1 // pred_check
      _
    $region11: #{tpu_custom_call.1} parent=1 // pred_check_branch
      %21 = sbr.rel (0) target = $region13
    $region12: #{tpu_custom_call.1} parent=1 // pred_region
      _
    $region13: #{tpu_custom_call.1} parent=1 // pred_fallthru
      _
    // Predicated region
    $region14: #{tpu_custom_call.1} parent=1 // pred_check
      _
    $region15: #{tpu_custom_call.1} parent=1 // pred_check_branch
      %23 = sbr.rel (0) target = $region17
    $region16: #{tpu_custom_call.1} parent=1 // pred_region
      _
    $region17: #{tpu_custom_call.1} parent=1 // pred_fallthru
      _
    // Predicated region
    $region18: #{tpu_custom_call.1} parent=1 // pred_check
      _
    $region19: #{tpu_custom_call.1} parent=1 // pred_check_branch
      %25 = sbr.rel (0) target = $region21
    $region20: #{tpu_custom_call.1} parent=1 // pred_region
      _
    $region21: #{tpu_custom_call.1} parent=1 // pred_fallthru
      _
    // Predicated region
    $region22: #{tpu_custom_call.1} parent=1 // pred_check
      _
    $region23: #{tpu_custom_call.1} parent=1 // pred_check_branch
      %27 = sbr.rel (0) target = $region25
    $region24: #{tpu_custom_call.1} parent=1 // pred_region
      _
    $region25: #{tpu_custom_call.1} parent=1 // pred_fallthru
      _
    // Predicated region
    $region26: #{tpu_custom_call.1} parent=1 // pred_check
      _
    $region27: #{tpu_custom_call.1} parent=1 // pred_check_branch
      %29 = sbr.rel (0) target = $region29
    $region28: #{tpu_custom_call.1} parent=1 // pred_region
      _
    $region29: #{tpu_custom_call.1} parent=1 // pred_fallthru
      _
    // Predicated region
    $region30: #{tpu_custom_call.1} parent=1 // pred_check
      _
    $region31: #{tpu_custom_call.1} parent=1 // pred_check_branch
      %31 = sbr.rel (0) target = $region33
    $region32: #{tpu_custom_call.1} parent=1 // pred_region
      _
    $region33: #{tpu_custom_call.1} parent=1 // pred_fallthru
      _
    // Predicated region
    $region34: #{tpu_custom_call.1} parent=1 // pred_check
      _
    $region35: #{tpu_custom_call.1} parent=1 // pred_check_branch
      %33 = sbr.rel (0) target = $region37
    $region36: #{tpu_custom_call.1} parent=1 // pred_region
      _
    $region37: #{tpu_custom_call.1} parent=1 // pred_fallthru
      _
    // Predicated region
    $region38: #{tpu_custom_call.1} parent=1 // pred_check
      _
    $region39: #{tpu_custom_call.1} parent=1 // pred_check_branch
      %35 = sbr.rel (0) target = $region41
    $region40: #{tpu_custom_call.1} parent=1 // pred_region
      _
    $region41: #{tpu_custom_call.1} parent=1 // pred_fallthru
      _
    %v36 = vld [vmem:[%s0] sm:$0xff]
    %v37 = vld [vmem:[%s1] sm:$0xff]
    %v38 = vld [vmem:[%s1 + $0x8] sm:$0xff]
    %v39 = vld [vmem:[%s1 + $0x10] sm:$0xff]
    %v40 = vld [vmem:[%s1 + $0x18] sm:$0xff]
    %v41 = vld [vmem:[%s1 + $0x20] sm:$0xff]
    %v42 = vld [vmem:[%s1 + $0x28] sm:$0xff]
    %v43 = vld [vmem:[%s1 + $0x30] sm:$0xff]
    %v44 = vld [vmem:[%s1 + $0x38] sm:$0xff]
    %v45 = vld [vmem:[%s1 + $0x40] sm:$0xff]
    %v46 = vld [vmem:[%s1 + $0x48] sm:$0xff]
    %v47 = vld [vmem:[%s1 + $0x50] sm:$0xff]
    %v48 = vld [vmem:[%s1 + $0x58] sm:$0xff]
    %v49 = vld [vmem:[%s1 + $0x60] sm:$0xff]
    %v50 = vld [vmem:[%s1 + $0x68] sm:$0xff]
    %v51 = vld [vmem:[%s1 + $0x70] sm:$0xff]
    %v52 = vld [vmem:[%s2] sm:$0x1]
    %v54 = vperm.slane %v52, 0
    %vm56 = vcmask 982016
    %v58 = vsel %vm56, %v36, 0
    %60 = vmatpush.msra.mxu0 0.0
    %61 = vmatpush.msra.mxu0 %v51
    %62 = vmatpush.msra.mxu0 %v50
    %63 = vmatpush.msra.mxu0 %v49
    %64 = vmatpush.msra.mxu0 %v48
    %65 = vmatpush.msra.mxu0 %v47
    %66 = vmatpush.msra.mxu0 %v46
    %67 = vmatpush.msra.mxu0 %v45
    %68 = vmatpush.msra.mxu0 %v44
    %69 = vmatpush.msra.mxu0 %v43
    %70 = vmatpush.msra.mxu0 %v42
    %71 = vmatpush.msra.mxu0 %v41
    %72 = vmatpush.msra.mxu0 %v40
    %73 = vmatpush.msra.mxu0 %v39
    %74 = vmatpush.msra.mxu0 %v38
    %75 = vmatpush.msra.mxu0 %v37
    %76 = vmatmul.f32.gmra.mxu0 %v58
    %v77 = vpop.f32.mrf.mxu0
    %v78 = vadd.f32 %v54, %v77
    %79 = vdwg.mxu0
    %vm80 = vcmp.gt.f32.partialorder %v78, 0.0
    %v81 = vmul.f32 %v78, 0.01
    %v82 = vsel %vm80, %v78, %v81
    %v83 = vld [vmem:[%s3] sm:$0xff]
    %v84 = vld [vmem:[%s3 + $0x8] sm:$0xff]
    %v85 = vld [vmem:[%s3 + $0x10] sm:$0xff]
    %v86 = vld [vmem:[%s3 + $0x18] sm:$0xff]
    %v87 = vld [vmem:[%s3 + $0x20] sm:$0xff]
    %v88 = vld [vmem:[%s3 + $0x28] sm:$0xff]
    %v89 = vld [vmem:[%s3 + $0x30] sm:$0xff]
    %v90 = vld [vmem:[%s3 + $0x38] sm:$0xff]
    %v91 = vld [vmem:[%s3 + $0x40] sm:$0xff]
    %v92 = vld [vmem:[%s3 + $0x48] sm:$0xff]
    %v93 = vld [vmem:[%s3 + $0x50] sm:$0xff]
    %v94 = vld [vmem:[%s3 + $0x58] sm:$0xff]
    %v95 = vld [vmem:[%s3 + $0x60] sm:$0xff]
    %v96 = vld [vmem:[%s3 + $0x68] sm:$0xff]
    %v97 = vld [vmem:[%s3 + $0x70] sm:$0xff]
    %v98 = vld [vmem:[%s4] sm:$0x1]
    %v100 = vperm.slane %v98, 0
    %102 = vmatpush.msra.mxu0 0.0
    %103 = vmatpush.msra.mxu0 %v97
    %104 = vmatpush.msra.mxu0 %v96
    %105 = vmatpush.msra.mxu0 %v95
    %106 = vmatpush.msra.mxu0 %v94
    %107 = vmatpush.msra.mxu0 %v93
    %108 = vmatpush.msra.mxu0 %v92
    %109 = vmatpush.msra.mxu0 %v91
    %110 = vmatpush.msra.mxu0 %v90
    %111 = vmatpush.msra.mxu0 %v89
    %112 = vmatpush.msra.mxu0 %v88
    %113 = vmatpush.msra.mxu0 %v87
    %114 = vmatpush.msra.mxu0 %v86
    %115 = vmatpush.msra.mxu0 %v85
    %116 = vmatpush.msra.mxu0 %v84
    %117 = vmatpush.msra.mxu0 %v83
    %118 = vmatmul.f32.gmra.mxu0 %v58
    %v119 = vpop.f32.mrf.mxu0
    %v120 = vadd.f32 %v100, %v119
    %121 = vdwg.mxu0
    %vm122 = vcmp.gt.f32.partialorder %v120, 0.0
    %v123 = vmul.f32 %v120, 0.01
    %v124 = vsel %vm122, %v120, %v123
    %v125 = vxor.u32 %v124, 2147483648
    %v126 = vmul.f32 %v125, 1.442695
    %v127 = vpow.pop %v126
    %v128 = vadd.f32 %v127, 1.0
    %v129 = vrcp.pop %v128
    %v130 = vmul.f32 %v128, %v129
    %v131 = vsub.f32 1.0, %v130
    %v132 = vmul.f32 %v129, %v131
    %v133 = vadd.f32 %v129, %v132
    %vm134 = vweird.f32 %v128
    %vm135 = vweird.f32 %v129
    %vm136 = vmor %vm134, %vm135
    %v137 = vsel %vm136, %v129, %v133
    %v138 = vand.u32 2147483647, %v128
    %vm139 = vcmp.eq.f32.partialorder %v138, 8.507059e+37
    %v140 = vand.u32 %v128, 2147483648
    %v141 = vor.u32 1.1754944e-38, %v140
    %v142 = vsel %vm139, %v141, %v137
    %v143 = vmul.f32 1.0, %v142
    %v144 = vmul.f32 %v82, %v143
    %v145 = vld [vmem:[%s5] sm:$0xff]
    %v146 = vld [vmem:[%s5 + $0x8] sm:$0xff]
    %v147 = vld [vmem:[%s5 + $0x10] sm:$0xff]
    %v148 = vld [vmem:[%s5 + $0x18] sm:$0xff]
    %v149 = vld [vmem:[%s5 + $0x20] sm:$0xff]
    %v150 = vld [vmem:[%s5 + $0x28] sm:$0xff]
    %v151 = vld [vmem:[%s5 + $0x30] sm:$0xff]
    %v152 = vld [vmem:[%s5 + $0x38] sm:$0xff]
    %v153 = vld [vmem:[%s6] sm:$0xff]
    %v154 = vld [vmem:[%s6 + $0x8] sm:$0xff]
    %v155 = vld [vmem:[%s6 + $0x10] sm:$0xff]
    %v156 = vld [vmem:[%s6 + $0x18] sm:$0xff]
    %v157 = vld [vmem:[%s6 + $0x20] sm:$0xff]
    %v158 = vld [vmem:[%s6 + $0x28] sm:$0xff]
    %v159 = vld [vmem:[%s6 + $0x30] sm:$0xff]
    %v160 = vld [vmem:[%s6 + $0x38] sm:$0xff]
    %v161 = vld [vmem:[%s7] sm:$0x1]
    %v163 = vperm.slane %v161, 0
    %vm165 = vcmask 523264
    %v167 = vsel %vm165, %v144, 0
    %169 = vmatpush.msra.mxu0 0.0
    %170 = vmatpush.msra.mxu0 0.0
    %171 = vmatpush.msra.mxu0 0.0
    %172 = vmatpush.msra.mxu0 0.0
    %173 = vmatpush.msra.mxu0 0.0
    %174 = vmatpush.msra.mxu0 0.0
    %175 = vmatpush.msra.mxu0 0.0
    %176 = vmatpush.msra.mxu0 0.0
    %177 = vmatpush.msra.mxu0 %v160
    %178 = vmatpush.msra.mxu0 %v159
    %179 = vmatpush.msra.mxu0 %v158
    %180 = vmatpush.msra.mxu0 %v157
    %181 = vmatpush.msra.mxu0 %v156
    %182 = vmatpush.msra.mxu0 %v155
    %183 = vmatpush.msra.mxu0 %v154
    %184 = vmatpush.msra.mxu0 %v153
    %185 = vmatmul.f32.gmra.mxu0 %v167
    %v186 = vpop.f32.mrf.mxu0
    %v187 = vadd.f32 %v163, %v186
    %188 = vdwg.mxu0
    %vm189 = vcmp.gt.f32.partialorder %v187, 0.0
    %v190 = vmul.f32 %v187, 0.01
    %v191 = vsel %vm189, %v187, %v190
    %v192 = vld [vmem:[%s8] sm:$0xff]
    %v193 = vld [vmem:[%s8 + $0x8] sm:$0xff]
    %v194 = vld [vmem:[%s8 + $0x10] sm:$0xff]
    %v195 = vld [vmem:[%s8 + $0x18] sm:$0xff]
    %vm196 = vcmask 261120
    %v198 = vsel %vm196, %v191, 0
    %200 = vmatpush.msra.mxu0 0.0
    %201 = vmatpush.msra.mxu0 0.0
    %202 = vmatpush.msra.mxu0 0.0
    %203 = vmatpush.msra.mxu0 0.0
    %204 = vmatpush.msra.mxu0 0.0
    %205 = vmatpush.msra.mxu0 0.0
    %206 = vmatpush.msra.mxu0 0.0
    %207 = vmatpush.msra.mxu0 0.0
    %208 = vmatpush.msra.mxu0 0.0
    %209 = vmatpush.msra.mxu0 0.0
    %210 = vmatpush.msra.mxu0 0.0
    %211 = vmatpush.msra.mxu0 0.0
    %212 = vmatpush.msra.mxu0 %v195
    %213 = vmatpush.msra.mxu0 %v194
    %214 = vmatpush.msra.mxu0 %v193
    %215 = vmatpush.msra.mxu0 %v192
    %216 = vmatmul.f32.gmra.mxu0 %v198
    %v217 = vpop.f32.mrf.mxu0
    %v218 = vadd.f32 0.0, %v217
    %219 = vdwg.mxu0
    %v220 = vld [vmem:[%s9] sm:$0x1]
    %v221 = vadd.f32 %v144, %v218
    %v223 = vperm.slane %v220, 0
    %v225 = vadd.f32 %v221, %v223
    %226 = vst.msk [vmem:[#allocation2] sm:$0xff] %vm165, %v225
    %227 = vrot.lane.b32.xlu0 %v223, 64
    %v228 = vpop.permute.xlu0 %227
    %230 = vmatpush.msra.mxu0 0.0
    %231 = vmatpush.msra.mxu0 0.0
    %232 = vmatpush.msra.mxu0 0.0
    %233 = vmatpush.msra.mxu0 0.0
    %234 = vmatpush.msra.mxu0 0.0
    %235 = vmatpush.msra.mxu0 0.0
    %236 = vmatpush.msra.mxu0 0.0
    %237 = vmatpush.msra.mxu0 0.0
    %238 = vmatpush.msra.mxu0 %v152
    %239 = vmatpush.msra.mxu0 %v151
    %240 = vmatpush.msra.mxu0 %v150
    %241 = vmatpush.msra.mxu0 %v149
    %242 = vmatpush.msra.mxu0 %v148
    %243 = vmatpush.msra.mxu0 %v147
    %244 = vmatpush.msra.mxu0 %v146
    %245 = vmatpush.msra.mxu0 %v145
    %246 = vmatmul.f32.gmra.mxu0 %v167
    %v247 = vpop.f32.mrf.mxu0
    %v248 = vadd.f32 %v228, %v247
    %249 = vdwg.mxu0
    %251 = vrot.lane.b32.xlu0 %v248, 64
    %v252 = vpop.permute.xlu0 %251
    %vm254 = vcmask 1048064
    %255 = vst.msk [vmem:[#allocation2] sm:$0xff] %vm254, %v252
    // Predicated region
    $region42: #{tpu_custom_call.1} parent=1 // pred_check
      _
    $region43: #{tpu_custom_call.1} parent=1 // pred_check_branch
      %257 = sbr.rel (0) target = $region45
    $region44: #{tpu_custom_call.1} parent=1 // pred_region
      %259 = vsyncadd [#allocation3], 0
      %s261 = sshll.u32 [#allocation2], 4
      %s262 = int_to_ptr.vmem [resolvable:$true] %s261
      %s263 = sshll.u32 %s10, 4
      %s264 = int_to_ptr.hbm [resolvable:$true] %s263
      %266 = dma.vmem_to_hbm [thread:$0]  %s262, 128, %s264, [#allocation3]
    $region45: #{tpu_custom_call.1} parent=1 // pred_fallthru
      _
    // Predicated region
    $region46: #{tpu_custom_call.1} parent=1 // pred_check
      _
    $region47: #{tpu_custom_call.1} parent=1 // pred_check_branch
      %268 = sbr.rel (0) target = $region49
    $region48: #{tpu_custom_call.1} parent=1 // pred_region
      %270 = dma.done [#allocation3], 128
    $region49: #{tpu_custom_call.1} parent=1 // pred_fallthru
      _
    %271 = vsyncpa [#allocation3], 1

</llo_original>
